<compile_context>
chip_gen: v6e
topology: v6e:2x2x1
jax: 0.10.0
libtpu: 0.0.40
codegen_flags: <defaults>
</compile_context>

<pallas_src>
import functools
import numpy as np

import jax
import jax.numpy as jnp
from jax.experimental import pallas as pl
from jax.experimental.pallas import tpu as pltpu

ALPHA = 0.25
GAMMA = 2.0  # hard-coded in the reference; p**2 implemented as p*p
EPS = 1e-8


def _round_up(x, m):
    return ((x + m - 1) // m) * m


# ----------------------------------------------------------------------------
# Pallas kernel: one row-tile of the matching cost matrix C  [TM, T_pad]
# ----------------------------------------------------------------------------
def _matcher_cost_kernel(logits_ref, onehot_ref, hand_ref, obj_ref,
                         tgtkey_t_ref, hand_sel_ref, comb_mask_ref,
                         c_ref, *, cost_class_w, key_dim):
    # --- focal-style classification cost -------------------------------------
    # Gather FIRST (MXU): one-hot columns pick a single logit each, so applying
    # the elementwise focal math afterwards is exactly d[:, tgt_ids].
    logits_sel = jnp.dot(logits_ref[...], onehot_ref[...],
                         preferred_element_type=jnp.float32)        # [TM, Tp]
    p = jax.nn.sigmoid(logits_sel)
    neg_cost = (1.0 - ALPHA) * (p * p) * (-jnp.log(1.0 - p + EPS))
    pos_cost = ALPHA * ((1.0 - p) * (1.0 - p)) * (-jnp.log(p + EPS))
    cost_class = pos_cost - neg_cost                                 # [TM, Tp]
    if cost_class_w != 1.0:
        cost_class = cost_class * jnp.float32(cost_class_w)

    # --- fused keypoint L1 cdist cost ----------------------------------------
    hand = hand_ref[...]                                             # [TM, Dk]
    obj = obj_ref[...]                                               # [TM, Dk]
    # per-target-column selector: hand columns read hand preds, others obj
    is_hand = jnp.broadcast_to(hand_sel_ref[...] != 0.0, cost_class.shape)

    acc = jnp.zeros_like(cost_class)
    # Dk is small & static -> static unroll of cheap lane/sublane slices.
    # TODO(synk): for large key dims switch to lax.fori_loop(unroll=True) to
    # bound live ranges.
    for dk in range(key_dim):
        tgt_row = tgtkey_t_ref[dk:dk + 1, :]                         # [1, Tp]
        pred_col = jnp.where(is_hand, hand[:, dk:dk + 1], obj[:, dk:dk + 1])
        acc = acc + jnp.abs(pred_col - tgt_row)

    # comb_mask already carries the cost_keypoint weight and zeros the
    # background (label-0) and pad columns, as in the reference.
    c_ref[...] = comb_mask_ref[...] * acc + cost_class


def _compute_cost_matrix(logits_flat, onehot, hand_flat, obj_flat,
                         tgt_key_t, hand_sel, comb_mask,
                         cost_class_w, tm):
    n_pad, num_classes = logits_flat.shape
    t_pad = onehot.shape[1]
    key_dim = hand_flat.shape[1]
    kernel = functools.partial(_matcher_cost_kernel,
                               cost_class_w=float(cost_class_w),
                               key_dim=int(key_dim))
    grid = (n_pad // tm,)
    return pl.pallas_call(
        kernel,
        out_shape=jax.ShapeDtypeStruct((n_pad, t_pad), jnp.float32),
        grid_spec=pltpu.PrefetchScalarGridSpec(
            num_scalar_prefetch=0,
            grid=grid,
            in_specs=[
                pl.BlockSpec((tm, num_classes), lambda i: (i, 0)),   # logits
                pl.BlockSpec((num_classes, t_pad), lambda i: (0, 0)),  # onehot
                pl.BlockSpec((tm, key_dim), lambda i: (i, 0)),       # hand
                pl.BlockSpec((tm, key_dim), lambda i: (i, 0)),       # obj
                pl.BlockSpec((key_dim, t_pad), lambda i: (0, 0)),    # tgt_key^T
                pl.BlockSpec((1, t_pad), lambda i: (0, 0)),          # hand sel
                pl.BlockSpec((1, t_pad), lambda i: (0, 0)),          # comb mask
            ],
            out_specs=pl.BlockSpec((tm, t_pad), lambda i: (i, 0)),
        ),
        compiler_params=pltpu.CompilerParams(
            dimension_semantics=("parallel",),
            vmem_limit_bytes=32 * 1024 * 1024,
        ),
    )(logits_flat, onehot, hand_flat, obj_flat, tgt_key_t, hand_sel, comb_mask)


# ----------------------------------------------------------------------------
# Host-side assignment solver (same role as scipy in the reference)
# ----------------------------------------------------------------------------
def _linear_sum_assignment(cost):
    try:
        from scipy.optimize import linear_sum_assignment
        return linear_sum_assignment(cost)
    except Exception:
        # exact brute force for the tiny per-batch problems in this demo;
        # handles both n_rows >= n_cols and n_cols > n_rows.
        import itertools
        n_rows, n_cols = cost.shape
        best, best_cost = None, np.inf
        if n_cols <= n_rows:
            for perm in itertools.permutations(range(n_rows), n_cols):
                c = sum(cost[perm[j], j] for j in range(n_cols))
                if c < best_cost:
                    best_cost, best = c, perm
            rows = np.asarray(best)
            cols = np.arange(n_cols)
        else:
            for perm in itertools.permutations(range(n_cols), n_rows):
                c = sum(cost[i, perm[i]] for i in range(n_rows))
                if c < best_cost:
                    best_cost, best = c, perm
            rows = np.arange(n_rows)
            cols = np.asarray(best)
        order = np.argsort(rows)
        return rows[order], cols[order]


# ----------------------------------------------------------------------------
# ArcticMatcher forward (glue in plain numpy/JAX, hot path in Pallas)
# ----------------------------------------------------------------------------
def arctic_matcher_forward(outputs, targets, cost_class=1.0, cost_keypoint=1.0):
    pred_logits = outputs['pred_logits']            # [bs, nq, num_classes]
    bs, nq, num_classes = pred_logits.shape

    is_valid = targets['is_valid']
    labels_valid = [t for idx, t in enumerate(targets['labels']) if is_valid[idx] == 1]
    tgt_ids = np.asarray(sum(labels_valid, []), dtype=np.int32)
    t_total = len(tgt_ids)
    if t_total == 0:
        return 0

    l_hand_idx = tgt_ids == 12
    r_hand_idx = tgt_ids == 13
    obj_idx = (tgt_ids != 0) & (tgt_ids != 12) & (tgt_ids != 13)

    # keypoint targets [T, Dk]
    tgt_key = np.concatenate(
        [np.asarray(k, dtype=np.float32)
         for idx, k in enumerate(targets['keypoints']) if is_valid[idx] == 1],
        axis=0)
    key_dim = tgt_key.shape[1]

    # --- pad the target dim to a multiple of 128 (lane-dense, no recompiles) --
    t_pad = max(128, _round_up(t_total, 128))

    onehot = np.zeros((num_classes, t_pad), np.float32)
    onehot[tgt_ids, np.arange(t_total)] = 1.0

    tgt_key_t = np.zeros((key_dim, t_pad), np.float32)
    tgt_key_t[:, :t_total] = tgt_key.T

    hand_sel = np.zeros((1, t_pad), np.float32)     # 1 -> use hand preds
    hand_sel[0, :t_total] = (l_hand_idx | r_hand_idx).astype(np.float32)

    comb_mask = np.zeros((1, t_pad), np.float32)    # zeros background & pad
    comb_mask[0, :t_total] = float(cost_keypoint) * (
        (l_hand_idx | r_hand_idx | obj_idx).astype(np.float32))

    # --- pad the row dim to a multiple of the row tile ------------------------
    n_rows = bs * nq
    tm = 256 if n_rows >= 256 else _round_up(n_rows, 8)
    n_pad = _round_up(n_rows, tm)

    def prep(x, feat):
        x = jnp.asarray(x, jnp.float32).reshape(n_rows, feat)
        if n_pad != n_rows:
            x = jnp.concatenate(
                [x, jnp.zeros((n_pad - n_rows, feat), jnp.float32)], axis=0)
        return x

    logits_flat = prep(pred_logits, num_classes)
    hand_flat = prep(outputs['pred_hand_key'], key_dim)
    obj_flat = prep(outputs['pred_obj_key'], key_dim)

    C = _compute_cost_matrix(
        logits_flat, jnp.asarray(onehot), hand_flat, obj_flat,
        jnp.asarray(tgt_key_t), jnp.asarray(hand_sel), jnp.asarray(comb_mask),
        cost_class, tm)
    C = jax.block_until_ready(C)
    C_np = np.asarray(C)[:n_rows, :t_total].reshape(bs, nq, t_total)

    sizes = [len(t) for idx, t in enumerate(targets['labels']) if is_valid[idx] == 1]
    # replicate C.split(sizes, -1) + enumerate(c[i]) exactly
    offsets = np.cumsum([0] + sizes)
    indices = []
    for i in range(len(sizes)):
        c_i = C_np[i, :, offsets[i]:offsets[i + 1]]
        indices.append(_linear_sum_assignment(c_i))
    return [(np.asarray(i, dtype=np.int64), np.asarray(j, dtype=np.int64))
            for i, j in indices], C_np


# ----------------------------------------------------------------------------
# Pure-JAX reference for the cost matrix (validation of the Pallas kernel)
# ----------------------------------------------------------------------------
def _ref_cost(logits, onehot, hand, obj, tgt_key_t, hand_mask, obj_mask,
              cost_class_w, cost_keypoint_w):
    p = jax.nn.sigmoid(logits)
    neg = (1 - ALPHA) * (p * p) * (-jnp.log(1 - p + EPS))
    pos = ALPHA * ((1 - p) * (1 - p)) * (-jnp.log(p + EPS))
    cost_class = (pos - neg) @ onehot
    tk = tgt_key_t.T
    cdist_hand = jnp.abs(hand[:, None, :] - tk[None, :, :]).sum(-1)
    cdist_obj = jnp.abs(obj[:, None, :] - tk[None, :, :]).sum(-1)
    cost_kp = hand_mask * cdist_hand + obj_mask * cdist_obj
    return cost_keypoint_w * cost_kp + cost_class_w * cost_class


if __name__ == "__main__":
    key = jax.random.PRNGKey(0)
    bs, nq, num_classes, key_dim = 2, 8, 16, 16

    k1, k2, k3, k4 = jax.random.split(key, 4)
    pred_logits = jax.random.normal(k1, (bs, nq, num_classes), jnp.float32)
    pred_hand_key = jax.random.normal(k2, (bs, nq, key_dim), jnp.float32)
    pred_obj_key = jax.random.normal(k3, (bs, nq, key_dim), jnp.float32)

    # targets: batch 0 has labels [12, 5, 0]; batch 1 has [13, 3, 7, 2]
    labels = [[12, 5, 0], [13, 3, 7, 2]]
    is_valid = [1, 1]
    kp_key = jax.random.split(k4, 2)
    keypoints = [np.asarray(jax.random.normal(kp_key[i], (len(labels[i]), key_dim),
                                              jnp.float32)) for i in range(bs)]

    outputs = {'pred_logits': pred_logits,
               'pred_hand_key': pred_hand_key,
               'pred_obj_key': pred_obj_key}
    targets = {'labels': labels, 'is_valid': is_valid, 'keypoints': keypoints}

    result, C_np = arctic_matcher_forward(outputs, targets,
                                          cost_class=1.0, cost_keypoint=1.0)

    # validate the Pallas cost matrix against a pure-JAX reference
    tgt_ids = np.asarray(sum(labels, []), dtype=np.int32)
    onehot = (np.arange(num_classes)[:, None] == tgt_ids[None, :]).astype(np.float32)
    tgt_key = np.concatenate(keypoints, axis=0)
    hand_mask = (((tgt_ids == 12) | (tgt_ids == 13)).astype(np.float32))[None, :]
    obj_mask = (((tgt_ids != 0) & (tgt_ids != 12) & (tgt_ids != 13))
                .astype(np.float32))[None, :]
    C_ref = _ref_cost(pred_logits.reshape(bs * nq, num_classes),
                      jnp.asarray(onehot),
                      pred_hand_key.reshape(bs * nq, -1),
                      pred_obj_key.reshape(bs * nq, -1),
                      jnp.asarray(tgt_key.T), jnp.asarray(hand_mask),
                      jnp.asarray(obj_mask), 1.0, 1.0)
    C_ref = np.asarray(jax.block_until_ready(C_ref)).reshape(bs, nq, -1)
    np.testing.assert_allclose(C_np, C_ref, rtol=1e-4, atol=1e-4)

    # TODO(synk): Hungarian linear_sum_assignment is a sequential host-side
    # algorithm (scipy / brute force here), same as the .cpu() path in PyTorch.
    assert len(result) == bs
    print("KERNEL_OK")
</pallas_src>

<mosaic_0001>
module attributes {stable_mosaic.version = 11 : i64} {
  func.func @_matcher_cost_kernel(%arg0: i32, %arg1: memref<16x16xf32, #tpu.memory_space<vmem>>, %arg2: memref<16x128xf32, #tpu.memory_space<vmem>>, %arg3: memref<16x16xf32, #tpu.memory_space<vmem>>, %arg4: memref<16x16xf32, #tpu.memory_space<vmem>>, %arg5: memref<16x128xf32, #tpu.memory_space<vmem>>, %arg6: memref<1x128xf32, #tpu.memory_space<vmem>>, %arg7: memref<1x128xf32, #tpu.memory_space<vmem>>, %arg8: memref<16x128xf32, #tpu.memory_space<vmem>>) attributes {dimension_semantics = [#tpu.dimension_semantics<parallel>], iteration_bounds = array<i64: 1>, scalar_prefetch = 0 : i64, scratch_operands = 0 : i64, tpu.core_type = #tpu.core_type<tc>, window_params = [{transform_indices = @transform_0, window_bounds = array<i64: 16, 16>}, {pipeline_mode = #tpu.pipeline_mode<synchronous>, transform_indices = @transform_1, window_bounds = array<i64: 16, 128>}, {transform_indices = @transform_2, window_bounds = array<i64: 16, 16>}, {transform_indices = @transform_3, window_bounds = array<i64: 16, 16>}, {pipeline_mode = #tpu.pipeline_mode<synchronous>, transform_indices = @transform_4, window_bounds = array<i64: 16, 128>}, {pipeline_mode = #tpu.pipeline_mode<synchronous>, transform_indices = @transform_5, window_bounds = array<i64: 1, 128>}, {pipeline_mode = #tpu.pipeline_mode<synchronous>, transform_indices = @transform_6, window_bounds = array<i64: 1, 128>}, {transform_indices = @transform_7, window_bounds = array<i64: 16, 128>}]} {
    %c0 = arith.constant 0 : index
    %c0_0 = arith.constant 0 : index
    %0 = vector.load %arg1[%c0, %c0_0] : memref<16x16xf32, #tpu.memory_space<vmem>>, vector<16x16xf32>
    %c0_1 = arith.constant 0 : index
    %c0_2 = arith.constant 0 : index
    %1 = vector.load %arg2[%c0_1, %c0_2] : memref<16x128xf32, #tpu.memory_space<vmem>>, vector<16x128xf32>
    %cst = arith.constant dense<0.000000e+00> : vector<16x128xf32>
    %2 = tpu.matmul %0, %1, %cst {dimension_numbers = #tpu.dot_dimension_numbers<[1], [0], [0], [1], [0, 0, 1, 1], [], []>} : vector<16x16xf32>, vector<16x128xf32>, vector<16x128xf32> -> vector<16x128xf32>
    %3 = arith.negf %2 : vector<16x128xf32>
    %4 = math.exp %3 : vector<16x128xf32>
    %cst_3 = arith.constant 1.000000e+00 : f32
    %5 = vector.broadcast %cst_3 : f32 to vector<16x128xf32>
    %6 = arith.addf %5, %4 : vector<16x128xf32>
    %7 = arith.divf %5, %6 : vector<16x128xf32>
    %8 = arith.mulf %7, %7 : vector<16x128xf32>
    %cst_4 = arith.constant 7.500000e-01 : f32
    %9 = vector.broadcast %cst_4 : f32 to vector<16x128xf32>
    %10 = arith.mulf %9, %8 : vector<16x128xf32>
    %cst_5 = arith.constant 1.000000e+00 : f32
    %11 = vector.broadcast %cst_5 : f32 to vector<16x128xf32>
    %12 = arith.subf %11, %7 : vector<16x128xf32>
    %cst_6 = arith.constant 9.99999993E-9 : f32
    %13 = vector.broadcast %cst_6 : f32 to vector<16x128xf32>
    %14 = arith.addf %12, %13 : vector<16x128xf32>
    %15 = math.log %14 : vector<16x128xf32>
    %cst_7 = arith.constant 0.000000e+00 : f32
    %16 = vector.broadcast %cst_7 : f32 to vector<16x128xf32>
    %17 = arith.subf %16, %15 : vector<16x128xf32>
    %18 = arith.mulf %10, %17 : vector<16x128xf32>
    %cst_8 = arith.constant 1.000000e+00 : f32
    %19 = vector.broadcast %cst_8 : f32 to vector<16x128xf32>
    %20 = arith.subf %19, %7 : vector<16x128xf32>
    %cst_9 = arith.constant 1.000000e+00 : f32
    %21 = vector.broadcast %cst_9 : f32 to vector<16x128xf32>
    %22 = arith.subf %21, %7 : vector<16x128xf32>
    %23 = arith.mulf %20, %22 : vector<16x128xf32>
    %cst_10 = arith.constant 2.500000e-01 : f32
    %24 = vector.broadcast %cst_10 : f32 to vector<16x128xf32>
    %25 = arith.mulf %24, %23 : vector<16x128xf32>
    %cst_11 = arith.constant 9.99999993E-9 : f32
    %26 = vector.broadcast %cst_11 : f32 to vector<16x128xf32>
    %27 = arith.addf %7, %26 : vector<16x128xf32>
    %28 = math.log %27 : vector<16x128xf32>
    %cst_12 = arith.constant 0.000000e+00 : f32
    %29 = vector.broadcast %cst_12 : f32 to vector<16x128xf32>
    %30 = arith.subf %29, %28 : vector<16x128xf32>
    %31 = arith.mulf %25, %30 : vector<16x128xf32>
    %32 = arith.subf %31, %18 : vector<16x128xf32>
    %c0_13 = arith.constant 0 : index
    %c0_14 = arith.constant 0 : index
    %33 = vector.load %arg3[%c0_13, %c0_14] : memref<16x16xf32, #tpu.memory_space<vmem>>, vector<16x16xf32>
    %c0_15 = arith.constant 0 : index
    %c0_16 = arith.constant 0 : index
    %34 = vector.load %arg4[%c0_15, %c0_16] : memref<16x16xf32, #tpu.memory_space<vmem>>, vector<16x16xf32>
    %c0_17 = arith.constant 0 : index
    %c0_18 = arith.constant 0 : index
    %35 = vector.load %arg6[%c0_17, %c0_18] : memref<1x128xf32, #tpu.memory_space<vmem>>, vector<1x128xf32>
    %cst_19 = arith.constant 0.000000e+00 : f32
    %36 = vector.broadcast %cst_19 : f32 to vector<1x128xf32>
    %37 = arith.cmpf one, %35, %36 : vector<1x128xf32>
    %38 = vector.shape_cast %37 : vector<1x128xi1> to vector<1x128xi1>
    %39 = vector.broadcast %38 : vector<1x128xi1> to vector<16x128xi1>
    %cst_20 = arith.constant 0.000000e+00 : f32
    %40 = vector.broadcast %cst_20 : f32 to vector<16x128xf32>
    %c0_21 = arith.constant 0 : index
    %c0_22 = arith.constant 0 : index
    %41 = vector.load %arg5[%c0_21, %c0_22] : memref<16x128xf32, #tpu.memory_space<vmem>>, vector<1x128xf32>
    %42 = vector.extract_strided_slice %33 {offsets = [0, 0], sizes = [16, 1], strides = [1, 1]} : vector<16x16xf32> to vector<16x1xf32>
    %43 = vector.extract_strided_slice %34 {offsets = [0, 0], sizes = [16, 1], strides = [1, 1]} : vector<16x16xf32> to vector<16x1xf32>
    %44 = vector.shape_cast %42 : vector<16x1xf32> to vector<16x1xf32>
    %45 = vector.broadcast %44 : vector<16x1xf32> to vector<16x128xf32>
    %46 = vector.shape_cast %43 : vector<16x1xf32> to vector<16x1xf32>
    %47 = vector.broadcast %46 : vector<16x1xf32> to vector<16x128xf32>
    %48 = arith.select %39, %45, %47 : vector<16x128xi1>, vector<16x128xf32>
    %49 = vector.broadcast %41 : vector<1x128xf32> to vector<16x128xf32>
    %50 = arith.subf %48, %49 : vector<16x128xf32>
    %51 = math.absf %50 : vector<16x128xf32>
    %52 = arith.addf %40, %51 : vector<16x128xf32>
    %c1 = arith.constant 1 : index
    %c0_23 = arith.constant 0 : index
    %53 = vector.load %arg5[%c1, %c0_23] : memref<16x128xf32, #tpu.memory_space<vmem>>, vector<1x128xf32>
    %54 = vector.extract_strided_slice %33 {offsets = [0, 1], sizes = [16, 1], strides = [1, 1]} : vector<16x16xf32> to vector<16x1xf32>
    %55 = vector.extract_strided_slice %34 {offsets = [0, 1], sizes = [16, 1], strides = [1, 1]} : vector<16x16xf32> to vector<16x1xf32>
    %56 = vector.shape_cast %54 : vector<16x1xf32> to vector<16x1xf32>
    %57 = vector.broadcast %56 : vector<16x1xf32> to vector<16x128xf32>
    %58 = vector.shape_cast %55 : vector<16x1xf32> to vector<16x1xf32>
    %59 = vector.broadcast %58 : vector<16x1xf32> to vector<16x128xf32>
    %60 = arith.select %39, %57, %59 : vector<16x128xi1>, vector<16x128xf32>
    %61 = vector.broadcast %53 : vector<1x128xf32> to vector<16x128xf32>
    %62 = arith.subf %60, %61 : vector<16x128xf32>
    %63 = math.absf %62 : vector<16x128xf32>
    %64 = arith.addf %52, %63 : vector<16x128xf32>
    %c2 = arith.constant 2 : index
    %c0_24 = arith.constant 0 : index
    %65 = vector.load %arg5[%c2, %c0_24] : memref<16x128xf32, #tpu.memory_space<vmem>>, vector<1x128xf32>
    %66 = vector.extract_strided_slice %33 {offsets = [0, 2], sizes = [16, 1], strides = [1, 1]} : vector<16x16xf32> to vector<16x1xf32>
    %67 = vector.extract_strided_slice %34 {offsets = [0, 2], sizes = [16, 1], strides = [1, 1]} : vector<16x16xf32> to vector<16x1xf32>
    %68 = vector.shape_cast %66 : vector<16x1xf32> to vector<16x1xf32>
    %69 = vector.broadcast %68 : vector<16x1xf32> to vector<16x128xf32>
    %70 = vector.shape_cast %67 : vector<16x1xf32> to vector<16x1xf32>
    %71 = vector.broadcast %70 : vector<16x1xf32> to vector<16x128xf32>
    %72 = arith.select %39, %69, %71 : vector<16x128xi1>, vector<16x128xf32>
    %73 = vector.broadcast %65 : vector<1x128xf32> to vector<16x128xf32>
    %74 = arith.subf %72, %73 : vector<16x128xf32>
    %75 = math.absf %74 : vector<16x128xf32>
    %76 = arith.addf %64, %75 : vector<16x128xf32>
    %c3 = arith.constant 3 : index
    %c0_25 = arith.constant 0 : index
    %77 = vector.load %arg5[%c3, %c0_25] : memref<16x128xf32, #tpu.memory_space<vmem>>, vector<1x128xf32>
    %78 = vector.extract_strided_slice %33 {offsets = [0, 3], sizes = [16, 1], strides = [1, 1]} : vector<16x16xf32> to vector<16x1xf32>
    %79 = vector.extract_strided_slice %34 {offsets = [0, 3], sizes = [16, 1], strides = [1, 1]} : vector<16x16xf32> to vector<16x1xf32>
    %80 = vector.shape_cast %78 : vector<16x1xf32> to vector<16x1xf32>
    %81 = vector.broadcast %80 : vector<16x1xf32> to vector<16x128xf32>
    %82 = vector.shape_cast %79 : vector<16x1xf32> to vector<16x1xf32>
    %83 = vector.broadcast %82 : vector<16x1xf32> to vector<16x128xf32>
    %84 = arith.select %39, %81, %83 : vector<16x128xi1>, vector<16x128xf32>
    %85 = vector.broadcast %77 : vector<1x128xf32> to vector<16x128xf32>
    %86 = arith.subf %84, %85 : vector<16x128xf32>
    %87 = math.absf %86 : vector<16x128xf32>
    %88 = arith.addf %76, %87 : vector<16x128xf32>
    %c4 = arith.constant 4 : index
    %c0_26 = arith.constant 0 : index
    %89 = vector.load %arg5[%c4, %c0_26] : memref<16x128xf32, #tpu.memory_space<vmem>>, vector<1x128xf32>
    %90 = vector.extract_strided_slice %33 {offsets = [0, 4], sizes = [16, 1], strides = [1, 1]} : vector<16x16xf32> to vector<16x1xf32>
    %91 = vector.extract_strided_slice %34 {offsets = [0, 4], sizes = [16, 1], strides = [1, 1]} : vector<16x16xf32> to vector<16x1xf32>
    %92 = vector.shape_cast %90 : vector<16x1xf32> to vector<16x1xf32>
    %93 = vector.broadcast %92 : vector<16x1xf32> to vector<16x128xf32>
    %94 = vector.shape_cast %91 : vector<16x1xf32> to vector<16x1xf32>
    %95 = vector.broadcast %94 : vector<16x1xf32> to vector<16x128xf32>
    %96 = arith.select %39, %93, %95 : vector<16x128xi1>, vector<16x128xf32>
    %97 = vector.broadcast %89 : vector<1x128xf32> to vector<16x128xf32>
    %98 = arith.subf %96, %97 : vector<16x128xf32>
    %99 = math.absf %98 : vector<16x128xf32>
    %100 = arith.addf %88, %99 : vector<16x128xf32>
    %c5 = arith.constant 5 : index
    %c0_27 = arith.constant 0 : index
    %101 = vector.load %arg5[%c5, %c0_27] : memref<16x128xf32, #tpu.memory_space<vmem>>, vector<1x128xf32>
    %102 = vector.extract_strided_slice %33 {offsets = [0, 5], sizes = [16, 1], strides = [1, 1]} : vector<16x16xf32> to vector<16x1xf32>
    %103 = vector.extract_strided_slice %34 {offsets = [0, 5], sizes = [16, 1], strides = [1, 1]} : vector<16x16xf32> to vector<16x1xf32>
    %104 = vector.shape_cast %102 : vector<16x1xf32> to vector<16x1xf32>
    %105 = vector.broadcast %104 : vector<16x1xf32> to vector<16x128xf32>
    %106 = vector.shape_cast %103 : vector<16x1xf32> to vector<16x1xf32>
    %107 = vector.broadcast %106 : vector<16x1xf32> to vector<16x128xf32>
    %108 = arith.select %39, %105, %107 : vector<16x128xi1>, vector<16x128xf32>
    %109 = vector.broadcast %101 : vector<1x128xf32> to vector<16x128xf32>
    %110 = arith.subf %108, %109 : vector<16x128xf32>
    %111 = math.absf %110 : vector<16x128xf32>
    %112 = arith.addf %100, %111 : vector<16x128xf32>
    %c6 = arith.constant 6 : index
    %c0_28 = arith.constant 0 : index
    %113 = vector.load %arg5[%c6, %c0_28] : memref<16x128xf32, #tpu.memory_space<vmem>>, vector<1x128xf32>
    %114 = vector.extract_strided_slice %33 {offsets = [0, 6], sizes = [16, 1], strides = [1, 1]} : vector<16x16xf32> to vector<16x1xf32>
    %115 = vector.extract_strided_slice %34 {offsets = [0, 6], sizes = [16, 1], strides = [1, 1]} : vector<16x16xf32> to vector<16x1xf32>
    %116 = vector.shape_cast %114 : vector<16x1xf32> to vector<16x1xf32>
    %117 = vector.broadcast %116 : vector<16x1xf32> to vector<16x128xf32>
    %118 = vector.shape_cast %115 : vector<16x1xf32> to vector<16x1xf32>
    %119 = vector.broadcast %118 : vector<16x1xf32> to vector<16x128xf32>
    %120 = arith.select %39, %117, %119 : vector<16x128xi1>, vector<16x128xf32>
    %121 = vector.broadcast %113 : vector<1x128xf32> to vector<16x128xf32>
    %122 = arith.subf %120, %121 : vector<16x128xf32>
    %123 = math.absf %122 : vector<16x128xf32>
    %124 = arith.addf %112, %123 : vector<16x128xf32>
    %c7 = arith.constant 7 : index
    %c0_29 = arith.constant 0 : index
    %125 = vector.load %arg5[%c7, %c0_29] : memref<16x128xf32, #tpu.memory_space<vmem>>, vector<1x128xf32>
    %126 = vector.extract_strided_slice %33 {offsets = [0, 7], sizes = [16, 1], strides = [1, 1]} : vector<16x16xf32> to vector<16x1xf32>
    %127 = vector.extract_strided_slice %34 {offsets = [0, 7], sizes = [16, 1], strides = [1, 1]} : vector<16x16xf32> to vector<16x1xf32>
    %128 = vector.shape_cast %126 : vector<16x1xf32> to vector<16x1xf32>
    %129 = vector.broadcast %128 : vector<16x1xf32> to vector<16x128xf32>
    %130 = vector.shape_cast %127 : vector<16x1xf32> to vector<16x1xf32>
    %131 = vector.broadcast %130 : vector<16x1xf32> to vector<16x128xf32>
    %132 = arith.select %39, %129, %131 : vector<16x128xi1>, vector<16x128xf32>
    %133 = vector.broadcast %125 : vector<1x128xf32> to vector<16x128xf32>
    %134 = arith.subf %132, %133 : vector<16x128xf32>
    %135 = math.absf %134 : vector<16x128xf32>
    %136 = arith.addf %124, %135 : vector<16x128xf32>
    %c8 = arith.constant 8 : index
    %c0_30 = arith.constant 0 : index
    %137 = vector.load %arg5[%c8, %c0_30] : memref<16x128xf32, #tpu.memory_space<vmem>>, vector<1x128xf32>
    %138 = vector.extract_strided_slice %33 {offsets = [0, 8], sizes = [16, 1], strides = [1, 1]} : vector<16x16xf32> to vector<16x1xf32>
    %139 = vector.extract_strided_slice %34 {offsets = [0, 8], sizes = [16, 1], strides = [1, 1]} : vector<16x16xf32> to vector<16x1xf32>
    %140 = vector.shape_cast %138 : vector<16x1xf32> to vector<16x1xf32>
    %141 = vector.broadcast %140 : vector<16x1xf32> to vector<16x128xf32>
    %142 = vector.shape_cast %139 : vector<16x1xf32> to vector<16x1xf32>
    %143 = vector.broadcast %142 : vector<16x1xf32> to vector<16x128xf32>
    %144 = arith.select %39, %141, %143 : vector<16x128xi1>, vector<16x128xf32>
    %145 = vector.broadcast %137 : vector<1x128xf32> to vector<16x128xf32>
    %146 = arith.subf %144, %145 : vector<16x128xf32>
    %147 = math.absf %146 : vector<16x128xf32>
    %148 = arith.addf %136, %147 : vector<16x128xf32>
    %c9 = arith.constant 9 : index
    %c0_31 = arith.constant 0 : index
    %149 = vector.load %arg5[%c9, %c0_31] : memref<16x128xf32, #tpu.memory_space<vmem>>, vector<1x128xf32>
    %150 = vector.extract_strided_slice %33 {offsets = [0, 9], sizes = [16, 1], strides = [1, 1]} : vector<16x16xf32> to vector<16x1xf32>
    %151 = vector.extract_strided_slice %34 {offsets = [0, 9], sizes = [16, 1], strides = [1, 1]} : vector<16x16xf32> to vector<16x1xf32>
    %152 = vector.shape_cast %150 : vector<16x1xf32> to vector<16x1xf32>
    %153 = vector.broadcast %152 : vector<16x1xf32> to vector<16x128xf32>
    %154 = vector.shape_cast %151 : vector<16x1xf32> to vector<16x1xf32>
    %155 = vector.broadcast %154 : vector<16x1xf32> to vector<16x128xf32>
    %156 = arith.select %39, %153, %155 : vector<16x128xi1>, vector<16x128xf32>
    %157 = vector.broadcast %149 : vector<1x128xf32> to vector<16x128xf32>
    %158 = arith.subf %156, %157 : vector<16x128xf32>
    %159 = math.absf %158 : vector<16x128xf32>
    %160 = arith.addf %148, %159 : vector<16x128xf32>
    %c10 = arith.constant 10 : index
    %c0_32 = arith.constant 0 : index
    %161 = vector.load %arg5[%c10, %c0_32] : memref<16x128xf32, #tpu.memory_space<vmem>>, vector<1x128xf32>
    %162 = vector.extract_strided_slice %33 {offsets = [0, 10], sizes = [16, 1], strides = [1, 1]} : vector<16x16xf32> to vector<16x1xf32>
    %163 = vector.extract_strided_slice %34 {offsets = [0, 10], sizes = [16, 1], strides = [1, 1]} : vector<16x16xf32> to vector<16x1xf32>
    %164 = vector.shape_cast %162 : vector<16x1xf32> to vector<16x1xf32>
    %165 = vector.broadcast %164 : vector<16x1xf32> to vector<16x128xf32>
    %166 = vector.shape_cast %163 : vector<16x1xf32> to vector<16x1xf32>
    %167 = vector.broadcast %166 : vector<16x1xf32> to vector<16x128xf32>
    %168 = arith.select %39, %165, %167 : vector<16x128xi1>, vector<16x128xf32>
    %169 = vector.broadcast %161 : vector<1x128xf32> to vector<16x128xf32>
    %170 = arith.subf %168, %169 : vector<16x128xf32>
    %171 = math.absf %170 : vector<16x128xf32>
    %172 = arith.addf %160, %171 : vector<16x128xf32>
    %c11 = arith.constant 11 : index
    %c0_33 = arith.constant 0 : index
    %173 = vector.load %arg5[%c11, %c0_33] : memref<16x128xf32, #tpu.memory_space<vmem>>, vector<1x128xf32>
    %174 = vector.extract_strided_slice %33 {offsets = [0, 11], sizes = [16, 1], strides = [1, 1]} : vector<16x16xf32> to vector<16x1xf32>
    %175 = vector.extract_strided_slice %34 {offsets = [0, 11], sizes = [16, 1], strides = [1, 1]} : vector<16x16xf32> to vector<16x1xf32>
    %176 = vector.shape_cast %174 : vector<16x1xf32> to vector<16x1xf32>
    %177 = vector.broadcast %176 : vector<16x1xf32> to vector<16x128xf32>
    %178 = vector.shape_cast %175 : vector<16x1xf32> to vector<16x1xf32>
    %179 = vector.broadcast %178 : vector<16x1xf32> to vector<16x128xf32>
    %180 = arith.select %39, %177, %179 : vector<16x128xi1>, vector<16x128xf32>
    %181 = vector.broadcast %173 : vector<1x128xf32> to vector<16x128xf32>
    %182 = arith.subf %180, %181 : vector<16x128xf32>
    %183 = math.absf %182 : vector<16x128xf32>
    %184 = arith.addf %172, %183 : vector<16x128xf32>
    %c12 = arith.constant 12 : index
    %c0_34 = arith.constant 0 : index
    %185 = vector.load %arg5[%c12, %c0_34] : memref<16x128xf32, #tpu.memory_space<vmem>>, vector<1x128xf32>
    %186 = vector.extract_strided_slice %33 {offsets = [0, 12], sizes = [16, 1], strides = [1, 1]} : vector<16x16xf32> to vector<16x1xf32>
    %187 = vector.extract_strided_slice %34 {offsets = [0, 12], sizes = [16, 1], strides = [1, 1]} : vector<16x16xf32> to vector<16x1xf32>
    %188 = vector.shape_cast %186 : vector<16x1xf32> to vector<16x1xf32>
    %189 = vector.broadcast %188 : vector<16x1xf32> to vector<16x128xf32>
    %190 = vector.shape_cast %187 : vector<16x1xf32> to vector<16x1xf32>
    %191 = vector.broadcast %190 : vector<16x1xf32> to vector<16x128xf32>
    %192 = arith.select %39, %189, %191 : vector<16x128xi1>, vector<16x128xf32>
    %193 = vector.broadcast %185 : vector<1x128xf32> to vector<16x128xf32>
    %194 = arith.subf %192, %193 : vector<16x128xf32>
    %195 = math.absf %194 : vector<16x128xf32>
    %196 = arith.addf %184, %195 : vector<16x128xf32>
    %c13 = arith.constant 13 : index
    %c0_35 = arith.constant 0 : index
    %197 = vector.load %arg5[%c13, %c0_35] : memref<16x128xf32, #tpu.memory_space<vmem>>, vector<1x128xf32>
    %198 = vector.extract_strided_slice %33 {offsets = [0, 13], sizes = [16, 1], strides = [1, 1]} : vector<16x16xf32> to vector<16x1xf32>
    %199 = vector.extract_strided_slice %34 {offsets = [0, 13], sizes = [16, 1], strides = [1, 1]} : vector<16x16xf32> to vector<16x1xf32>
    %200 = vector.shape_cast %198 : vector<16x1xf32> to vector<16x1xf32>
    %201 = vector.broadcast %200 : vector<16x1xf32> to vector<16x128xf32>
    %202 = vector.shape_cast %199 : vector<16x1xf32> to vector<16x1xf32>
    %203 = vector.broadcast %202 : vector<16x1xf32> to vector<16x128xf32>
    %204 = arith.select %39, %201, %203 : vector<16x128xi1>, vector<16x128xf32>
    %205 = vector.broadcast %197 : vector<1x128xf32> to vector<16x128xf32>
    %206 = arith.subf %204, %205 : vector<16x128xf32>
    %207 = math.absf %206 : vector<16x128xf32>
    %208 = arith.addf %196, %207 : vector<16x128xf32>
    %c14 = arith.constant 14 : index
    %c0_36 = arith.constant 0 : index
    %209 = vector.load %arg5[%c14, %c0_36] : memref<16x128xf32, #tpu.memory_space<vmem>>, vector<1x128xf32>
    %210 = vector.extract_strided_slice %33 {offsets = [0, 14], sizes = [16, 1], strides = [1, 1]} : vector<16x16xf32> to vector<16x1xf32>
    %211 = vector.extract_strided_slice %34 {offsets = [0, 14], sizes = [16, 1], strides = [1, 1]} : vector<16x16xf32> to vector<16x1xf32>
    %212 = vector.shape_cast %210 : vector<16x1xf32> to vector<16x1xf32>
    %213 = vector.broadcast %212 : vector<16x1xf32> to vector<16x128xf32>
    %214 = vector.shape_cast %211 : vector<16x1xf32> to vector<16x1xf32>
    %215 = vector.broadcast %214 : vector<16x1xf32> to vector<16x128xf32>
    %216 = arith.select %39, %213, %215 : vector<16x128xi1>, vector<16x128xf32>
    %217 = vector.broadcast %209 : vector<1x128xf32> to vector<16x128xf32>
    %218 = arith.subf %216, %217 : vector<16x128xf32>
    %219 = math.absf %218 : vector<16x128xf32>
    %220 = arith.addf %208, %219 : vector<16x128xf32>
    %c15 = arith.constant 15 : index
    %c0_37 = arith.constant 0 : index
    %221 = vector.load %arg5[%c15, %c0_37] : memref<16x128xf32, #tpu.memory_space<vmem>>, vector<1x128xf32>
    %222 = vector.extract_strided_slice %33 {offsets = [0, 15], sizes = [16, 1], strides = [1, 1]} : vector<16x16xf32> to vector<16x1xf32>
    %223 = vector.extract_strided_slice %34 {offsets = [0, 15], sizes = [16, 1], strides = [1, 1]} : vector<16x16xf32> to vector<16x1xf32>
    %224 = vector.shape_cast %222 : vector<16x1xf32> to vector<16x1xf32>
    %225 = vector.broadcast %224 : vector<16x1xf32> to vector<16x128xf32>
    %226 = vector.shape_cast %223 : vector<16x1xf32> to vector<16x1xf32>
    %227 = vector.broadcast %226 : vector<16x1xf32> to vector<16x128xf32>
    %228 = arith.select %39, %225, %227 : vector<16x128xi1>, vector<16x128xf32>
    %229 = vector.broadcast %221 : vector<1x128xf32> to vector<16x128xf32>
    %230 = arith.subf %228, %229 : vector<16x128xf32>
    %231 = math.absf %230 : vector<16x128xf32>
    %232 = arith.addf %220, %231 : vector<16x128xf32>
    %c0_38 = arith.constant 0 : index
    %c0_39 = arith.constant 0 : index
    %233 = vector.load %arg7[%c0_38, %c0_39] : memref<1x128xf32, #tpu.memory_space<vmem>>, vector<1x128xf32>
    %234 = vector.broadcast %233 : vector<1x128xf32> to vector<16x128xf32>
    %235 = arith.mulf %234, %232 : vector<16x128xf32>
    %236 = arith.addf %235, %32 : vector<16x128xf32>
    %c0_40 = arith.constant 0 : index
    %c0_41 = arith.constant 0 : index
    %237 = vector.load %arg8[%c0_40, %c0_41] : memref<16x128xf32, #tpu.memory_space<vmem>>, vector<16x128xf32>
    tpu.vector_store %arg8[%c0_40, %c0_41], %236 {strides = array<i32>} : memref<16x128xf32, #tpu.memory_space<vmem>>, vector<16x128xf32>,
    return
  }
  func.func @transform_0(%arg0: i32) -> (i32, i32) {
    %c0_i32 = arith.constant 0 : i32
    %c0_i32_0 = arith.constant 0 : i32
    return %arg0, %c0_i32 : i32, i32
  }
  func.func @transform_1(%arg0: i32) -> (i32, i32) {
    %c0_i32 = arith.constant 0 : i32
    %c0_i32_0 = arith.constant 0 : i32
    %c0_i32_1 = arith.constant 0 : i32
    return %c0_i32, %c0_i32_0 : i32, i32
  }
  func.func @transform_2(%arg0: i32) -> (i32, i32) {
    %c0_i32 = arith.constant 0 : i32
    %c0_i32_0 = arith.constant 0 : i32
    return %arg0, %c0_i32 : i32, i32
  }
  func.func @transform_3(%arg0: i32) -> (i32, i32) {
    %c0_i32 = arith.constant 0 : i32
    %c0_i32_0 = arith.constant 0 : i32
    return %arg0, %c0_i32 : i32, i32
  }
  func.func @transform_4(%arg0: i32) -> (i32, i32) {
    %c0_i32 = arith.constant 0 : i32
    %c0_i32_0 = arith.constant 0 : i32
    %c0_i32_1 = arith.constant 0 : i32
    return %c0_i32, %c0_i32_0 : i32, i32
  }
  func.func @transform_5(%arg0: i32) -> (i32, i32) {
    %c0_i32 = arith.constant 0 : i32
    %c0_i32_0 = arith.constant 0 : i32
    %c0_i32_1 = arith.constant 0 : i32
    return %c0_i32, %c0_i32_0 : i32, i32
  }
  func.func @transform_6(%arg0: i32) -> (i32, i32) {
    %c0_i32 = arith.constant 0 : i32
    %c0_i32_0 = arith.constant 0 : i32
    %c0_i32_1 = arith.constant 0 : i32
    return %c0_i32, %c0_i32_0 : i32, i32
  }
  func.func @transform_7(%arg0: i32) -> (i32, i32) {
    %c0_i32 = arith.constant 0 : i32
    %c0_i32_0 = arith.constant 0 : i32
    return %arg0, %c0_i32 : i32, i32
  }
}

</mosaic_0001>

<llo_original>
// kernel: tpu_custom_call.1
$region0: #{tpu_custom_call.1}
  #allocation0 [shape = 'u32[]', space=smem, size = 0x4, offset = 0x4, fixed_abs, tag = 'smem constant byte address 0x4 - core index']
  #allocation1 [shape = 'u32[144,128]{1,0:T(1,128)}', space=vmem, size = 0x12000, scoped, tag = 'internal scratch']
  %s0 = inlined_call_operand.hbm [shape: f32[16,16], index: 0, kind: input, shape index: {}]
  %s1 = inlined_call_operand.hbm [shape: f32[16,128], index: 1, kind: input, shape index: {}]
  %s2 = inlined_call_operand.hbm [shape: f32[16,16], index: 2, kind: input, shape index: {}]
  %s3 = inlined_call_operand.hbm [shape: f32[16,16], index: 3, kind: input, shape index: {}]
  %s4 = inlined_call_operand.hbm [shape: f32[16,128], index: 4, kind: input, shape index: {}]
  %s5 = inlined_call_operand.vmem [shape: f32[1,128], index: 5, kind: input, shape index: {}]
  %s6 = inlined_call_operand.vmem [shape: f32[1,128], index: 6, kind: input, shape index: {}]
  %s7 = inlined_call_operand.hbm [shape: f32[16,128], index: 7, kind: output, shape index: {}]
  %s8 = sld [smem:[#allocation0]]
  $region58: #{tpu_custom_call.1} parent=0
    _
  %s10 = ssub.s32 1, %s8
  %s11 = scalar_select 0, %s10, %s8
  $region1: #{tpu_custom_call.1} parent=0
    #allocation2 [shape = 'u8[8192]{0}', space=vmem, size = 0x2000, scoped, tag = 'input window, operand 0, single buffered']
    #allocation3 [shape = 's32[1]{0}', space=sflag, size = 0x4, scoped, tag = 'scoped memory for tpu_custom_call.1']
    #allocation4 [shape = 's32[1]{0}', space=sflag, size = 0x4, scoped, tag = 'scoped memory for tpu_custom_call.1']
    #allocation5 [shape = 'u8[8192]{0}', space=vmem, size = 0x2000, scoped, tag = 'input window, operand 1, single buffered']
    #allocation6 [shape = 's32[1]{0}', space=sflag, size = 0x4, scoped, tag = 'scoped memory for tpu_custom_call.1']
    #allocation7 [shape = 'u8[8192]{0}', space=vmem, size = 0x2000, scoped, tag = 'input window, operand 2, single buffered']
    #allocation8 [shape = 'u8[8192]{0}', space=vmem, size = 0x2000, scoped, tag = 'input window, operand 3, single buffered']
    #allocation9 [shape = 's32[1]{0}', space=sflag, size = 0x4, scoped, tag = 'scoped memory for tpu_custom_call.1']
    #allocation10 [shape = 'u8[8192]{0}', space=vmem, size = 0x2000, scoped, tag = 'input window, operand 4, single buffered']
    #allocation11 [shape = 'u8[8192]{0}', space=vmem, size = 0x2000, scoped, tag = 'output window, operand 0, single buffered']
    %12 = vsyncpa [#allocation3], 0
    %13 = vsyncpa [#allocation6], 0
    %14 = vsyncpa [#allocation9], 0
    %15 = vsyncpa [#allocation4], 0
    // Predicated region
    $region2: #{tpu_custom_call.1} parent=1 // pred_check
      _
    $region3: #{tpu_custom_call.1} parent=1 // pred_check_branch
      %17 = sbr.rel (0) target = $region5
    $region4: #{tpu_custom_call.1} parent=1 // pred_region
      %s19 = ssub.s32 256, 256
      %20 = vsyncadd [#allocation3], %s19
      %s21 = sshll.u32 [#allocation2], 4
      %s22 = int_to_ptr.vmem [resolvable:$true] %s21
      %27 = dma.hbm_to_vmem [thread:$0]  %s0, 256, %s22, [#allocation3], 128, 128, 8
    $region5: #{tpu_custom_call.1} parent=1 // pred_fallthru
      _
    // Predicated region
    $region6: #{tpu_custom_call.1} parent=1 // pred_check
      _
    $region7: #{tpu_custom_call.1} parent=1 // pred_check_branch
      %29 = sbr.rel (0) target = $region9
    $region8: #{tpu_custom_call.1} parent=1 // pred_region
      %s31 = ssub.s32 256, 256
      %32 = vsyncadd [#allocation6], %s31
      %s33 = sshll.u32 [#allocation5], 4
      %s34 = int_to_ptr.vmem [resolvable:$true] %s33
      %39 = dma.hbm_to_vmem [thread:$0]  %s1, 256, %s34, [#allocation6], 128, 128, 8
    $region9: #{tpu_custom_call.1} parent=1 // pred_fallthru
      _
    // Predicated region
    $region10: #{tpu_custom_call.1} parent=1 // pred_check
      _
    $region11: #{tpu_custom_call.1} parent=1 // pred_check_branch
      %41 = sbr.rel (0) target = $region13
    $region12: #{tpu_custom_call.1} parent=1 // pred_region
      %s43 = ssub.s32 256, 256
      %44 = vsyncadd [#allocation6], %s43
      %s45 = sshll.u32 [#allocation7], 4
      %s46 = int_to_ptr.vmem [resolvable:$true] %s45
      %51 = dma.hbm_to_vmem [thread:$0]  %s2, 256, %s46, [#allocation6], 128, 128, 8
    $region13: #{tpu_custom_call.1} parent=1 // pred_fallthru
      _
    // Predicated region
    $region14: #{tpu_custom_call.1} parent=1 // pred_check
      _
    $region15: #{tpu_custom_call.1} parent=1 // pred_check_branch
      %53 = sbr.rel (0) target = $region17
    $region16: #{tpu_custom_call.1} parent=1 // pred_region
      %s55 = ssub.s32 256, 256
      %56 = vsyncadd [#allocation9], %s55
      %s57 = sshll.u32 [#allocation8], 4
      %s58 = int_to_ptr.vmem [resolvable:$true] %s57
      %63 = dma.hbm_to_vmem [thread:$0]  %s3, 256, %s58, [#allocation9], 128, 128, 8
    $region17: #{tpu_custom_call.1} parent=1 // pred_fallthru
      _
    // Predicated region
    $region18: #{tpu_custom_call.1} parent=1 // pred_check
      _
    $region19: #{tpu_custom_call.1} parent=1 // pred_check_branch
      %65 = sbr.rel (0) target = $region21
    $region20: #{tpu_custom_call.1} parent=1 // pred_region
      %s67 = ssub.s32 256, 256
      %68 = vsyncadd [#allocation9], %s67
      %s69 = sshll.u32 [#allocation10], 4
      %s70 = int_to_ptr.vmem [resolvable:$true] %s69
      %75 = dma.hbm_to_vmem [thread:$0]  %s4, 256, %s70, [#allocation9], 128, 128, 8
    $region21: #{tpu_custom_call.1} parent=1 // pred_fallthru
      _
    // Predicated region
    $region22: #{tpu_custom_call.1} parent=1 // pred_check
      _
    $region23: #{tpu_custom_call.1} parent=1 // pred_check_branch
      %77 = sbr.rel (0) target = $region25
    $region24: #{tpu_custom_call.1} parent=1 // pred_region
      _
    $region25: #{tpu_custom_call.1} parent=1 // pred_fallthru
      _
    // Predicated region
    $region26: #{tpu_custom_call.1} parent=1 // pred_check
      _
    $region27: #{tpu_custom_call.1} parent=1 // pred_check_branch
      %79 = sbr.rel (0) target = $region29
    $region28: #{tpu_custom_call.1} parent=1 // pred_region
      _
    $region29: #{tpu_custom_call.1} parent=1 // pred_fallthru
      _
    // Predicated region
    $region30: #{tpu_custom_call.1} parent=1 // pred_check
      _
    $region31: #{tpu_custom_call.1} parent=1 // pred_check_branch
      %81 = sbr.rel (0) target = $region33
    $region32: #{tpu_custom_call.1} parent=1 // pred_region
      %82 = dma.done [#allocation3], 256
    $region33: #{tpu_custom_call.1} parent=1 // pred_fallthru
      _
    // Predicated region
    $region34: #{tpu_custom_call.1} parent=1 // pred_check
      _
    $region35: #{tpu_custom_call.1} parent=1 // pred_check_branch
      %84 = sbr.rel (0) target = $region37
    $region36: #{tpu_custom_call.1} parent=1 // pred_region
      %85 = dma.done [#allocation6], 256
    $region37: #{tpu_custom_call.1} parent=1 // pred_fallthru
      _
    // Predicated region
    $region38: #{tpu_custom_call.1} parent=1 // pred_check
      _
    $region39: #{tpu_custom_call.1} parent=1 // pred_check_branch
      %87 = sbr.rel (0) target = $region41
    $region40: #{tpu_custom_call.1} parent=1 // pred_region
      %88 = dma.done [#allocation6], 256
    $region41: #{tpu_custom_call.1} parent=1 // pred_fallthru
      _
    // Predicated region
    $region42: #{tpu_custom_call.1} parent=1 // pred_check
      _
    $region43: #{tpu_custom_call.1} parent=1 // pred_check_branch
      %90 = sbr.rel (0) target = $region45
    $region44: #{tpu_custom_call.1} parent=1 // pred_region
      %91 = dma.done [#allocation9], 256
    $region45: #{tpu_custom_call.1} parent=1 // pred_fallthru
      _
    // Predicated region
    $region46: #{tpu_custom_call.1} parent=1 // pred_check
      _
    $region47: #{tpu_custom_call.1} parent=1 // pred_check_branch
      %93 = sbr.rel (0) target = $region49
    $region48: #{tpu_custom_call.1} parent=1 // pred_region
      %94 = dma.done [#allocation9], 256
    $region49: #{tpu_custom_call.1} parent=1 // pred_fallthru
      _
    %v95 = vld [vmem:[#allocation2] sm:$0xff]
    %v96 = vld [vmem:[#allocation2 + $0x8] sm:$0xff]
    %v97 = vld [vmem:[#allocation5] sm:$0xff]
    %v98 = vld [vmem:[#allocation5 + $0x8] sm:$0xff]
    %vm99 = vcmask 130048
    %v101 = vsel %vm99, %v95, 0
    %v104 = vsel %vm99, %v96, 0
    %106 = vmatprep.subr.mxu0 0.0
    %107 = vmatpush1.msra.mxu0 0.0
    %108 = vmatprep.subr.mxu0 0.0
    %109 = vmatpush1.msra.mxu0 0.0
    %110 = vmatprep.subr.mxu0 0.0
    %111 = vmatpush1.msra.mxu0 0.0
    %112 = vmatprep.subr.mxu0 0.0
    %113 = vmatpush1.msra.mxu0 0.0
    %114 = vmatprep.subr.mxu0 0.0
    %115 = vmatpush1.msra.mxu0 0.0
    %116 = vmatprep.subr.mxu0 0.0
    %117 = vmatpush1.msra.mxu0 0.0
    %118 = vmatprep.subr.mxu0 0.0
    %119 = vmatpush1.msra.mxu0 0.0
    %120 = vmatprep.subr.mxu0 0.0
    %121 = vmatpush1.msra.mxu0 0.0
    %122 = vmatprep.subr.mxu0 0.0
    %123 = vmatpush1.msra.mxu0 0.0
    %124 = vmatprep.subr.mxu0 0.0
    %125 = vmatpush1.msra.mxu0 0.0
    %126 = vmatprep.subr.mxu0 0.0
    %127 = vmatpush1.msra.mxu0 0.0
    %128 = vmatprep.subr.mxu0 0.0
    %129 = vmatpush1.msra.mxu0 0.0
    %130 = vmatprep.subr.mxu0 0.0
    %131 = vmatpush1.msra.mxu0 0.0
    %132 = vmatprep.subr.mxu0 0.0
    %133 = vmatpush1.msra.mxu0 0.0
    %134 = vmatprep.subr.mxu0 0.0
    %135 = vmatpush1.msra.mxu0 %v98
    %136 = vmatprep.subr.mxu0 0.0
    %137 = vmatpush1.msra.mxu0 %v97
    %138 = vmatprep.subr.mxu0 0.0
    %139 = vmatpush2.msra.mxu0 0.0
    %140 = vmatprep.subr.mxu0 0.0
    %141 = vmatpush2.msra.mxu0 0.0
    %142 = vmatprep.subr.mxu0 0.0
    %143 = vmatpush2.msra.mxu0 0.0
    %144 = vmatprep.subr.mxu0 0.0
    %145 = vmatpush2.msra.mxu0 0.0
    %146 = vmatprep.subr.mxu0 0.0
    %147 = vmatpush2.msra.mxu0 0.0
    %148 = vmatprep.subr.mxu0 0.0
    %149 = vmatpush2.msra.mxu0 0.0
    %150 = vmatprep.subr.mxu0 0.0
    %151 = vmatpush2.msra.mxu0 0.0
    %152 = vmatprep.subr.mxu0 0.0
    %153 = vmatpush2.msra.mxu0 0.0
    %154 = vmatprep.subr.mxu0 0.0
    %155 = vmatpush2.msra.mxu0 0.0
    %156 = vmatprep.subr.mxu0 0.0
    %157 = vmatpush2.msra.mxu0 0.0
    %158 = vmatprep.subr.mxu0 0.0
    %159 = vmatpush2.msra.mxu0 0.0
    %160 = vmatprep.subr.mxu0 0.0
    %161 = vmatpush2.msra.mxu0 0.0
    %162 = vmatprep.subr.mxu0 0.0
    %163 = vmatpush2.msra.mxu0 0.0
    %164 = vmatprep.subr.mxu0 0.0
    %165 = vmatpush2.msra.mxu0 0.0
    %166 = vmatprep.subr.mxu0 0.0
    %167 = vmatpush2.msra.mxu0 0.0
    %168 = vmatprep.subr.mxu0 0.0
    %169 = vmatpush2.msra.mxu0 0.0
    %170 = vmatprep.mubr.f32.mxu0 0.0
    %171 = vmatmul.mubr.f32.gmra.mxu0 %v101
    %v172 = vpop.f32.mrf.mxu0
    %v173 = vadd.f32 0.0, %v172
    %v174 = vpop.f32.mrf.mxu0
    %175 = vmatprep.mubr.f32.mxu0 0.0
    %176 = vmatmul.mubr.f32.gmra.mxu0 %v104
    %v177 = vpop.f32.mrf.mxu0
    %v178 = vadd.f32 0.0, %v177
    %v179 = vpop.f32.mrf.mxu0
    %180 = vdwg.mxu0
    %v181 = vxor.u32 %v173, 2147483648
    %v182 = vxor.u32 %v178, 2147483648
    %v183 = vmul.f32 %v181, 1.442695
    %v184 = vpow.pop %v183
    %v185 = vmul.f32 %v182, 1.442695
    %v186 = vpow.pop %v185
    %v187 = vadd.f32 %v184, 1.0
    %v188 = vadd.f32 %v186, 1.0
    %v189 = vrcp.pop %v187
    %v190 = vmul.f32 1.0, %v189
    %v191 = vrcp.pop %v188
    %v192 = vmul.f32 1.0, %v191
    %v193 = vmul.f32 %v190, %v190
    %v194 = vmul.f32 %v192, %v192
    %v195 = vmul.f32 %v193, 0.75
    %v196 = vmul.f32 %v194, 0.75
    %v197 = vsub.f32 1.0, %v190
    %v198 = vsub.f32 1.0, %v192
    %v199 = vadd.f32 %v197, 1e-08
    %v200 = vadd.f32 %v198, 1e-08
    %v201 = vlog2.pop %v199
    %v202 = vmul.f32 %v201, 0.6931472
    %v203 = vlog2.pop %v200
    %v204 = vmul.f32 %v203, 0.6931472
    %v205 = vsub.f32 0.0, %v202
    %v206 = vsub.f32 0.0, %v204
    %v207 = vmul.f32 %v195, %v205
    %v208 = vmul.f32 %v196, %v206
    %v209 = vmul.f32 %v197, %v197
    %v210 = vmul.f32 %v198, %v198
    %v211 = vmul.f32 %v209, 0.25
    %v212 = vmul.f32 %v210, 0.25
    %v213 = vadd.f32 %v190, 1e-08
    %v214 = vadd.f32 %v192, 1e-08
    %v215 = vlog2.pop %v213
    %v216 = vmul.f32 %v215, 0.6931472
    %v217 = vlog2.pop %v214
    %v218 = vmul.f32 %v217, 0.6931472
    %v219 = vsub.f32 0.0, %v216
    %v220 = vsub.f32 0.0, %v218
    %v221 = vmul.f32 %v211, %v219
    %v222 = vmul.f32 %v212, %v220
    %v223 = vsub.f32 %v221, %v207
    %v224 = vsub.f32 %v222, %v208
    %v225 = vld [vmem:[#allocation7] sm:$0xff]
    %v226 = vld [vmem:[#allocation7 + $0x8] sm:$0xff]
    %v227 = vld [vmem:[#allocation8] sm:$0xff]
    %v228 = vld [vmem:[#allocation8 + $0x8] sm:$0xff]
    %v229 = vld [vmem:[%s5] sm:$0x1]
    %vm230 = vcmp.ne.f32.partialorder %v229, 0.0
    %v231 = vsel %vm230, 1, 0
    %v232 = vlaneseq
    %v233 = vshrl.u32 %v232, 7
    %v234 = vsub.s32 0, %v233
    %v235 = vrot.slane %v231, %v234
    %vm236 = vcmp.eq.s32.totalorder %v235, 1
    %v237 = vld [vmem:[#allocation10] sm:$0x1]
    %239 = vset.pattern.permute.xlu0 0
    %240 = vperm.xlu0 %239, %v225
    %v241 = vpop.permute.xlu0 %240
    %244 = vset.pattern.permute.xlu0 0
    %245 = vperm.xlu0 %244, %v226
    %v246 = vpop.permute.xlu0 %245
    %249 = vset.pattern.permute.xlu0 0
    %250 = vperm.xlu0 %249, %v227
    %v251 = vpop.permute.xlu0 %250
    %254 = vset.pattern.permute.xlu0 0
    %255 = vperm.xlu0 %254, %v228
    %v256 = vpop.permute.xlu0 %255
    %v258 = vsel %vm236, %v241, %v251
    %v259 = vsel %vm236, %v246, %v256
    %v260 = vlaneseq
    %v261 = vshrl.u32 %v260, 7
    %v262 = vsub.s32 0, %v261
    %v263 = vrot.slane %v237, %v262
    %v264 = vsub.f32 %v258, %v263
    %v265 = vsub.f32 %v259, %v263
    %v266 = vand.u32 2147483647, %v264
    %v267 = vand.u32 2147483647, %v265
    %v268 = vadd.f32 %v266, 0.0
    %v269 = vadd.f32 %v267, 0.0
    %v270 = vld [vmem:[#allocation10 + $0x1] sm:$0x1]
    %271 = vset.pattern.permute.xlu0 1
    %272 = vperm.xlu0 %271, %v225
    %v273 = vpop.permute.xlu0 %272
    %275 = vset.pattern.permute.xlu0 1
    %276 = vperm.xlu0 %275, %v226
    %v277 = vpop.permute.xlu0 %276
    %279 = vset.pattern.permute.xlu0 1
    %280 = vperm.xlu0 %279, %v227
    %v281 = vpop.permute.xlu0 %280
    %283 = vset.pattern.permute.xlu0 1
    %284 = vperm.xlu0 %283, %v228
    %v285 = vpop.permute.xlu0 %284
    %v287 = vsel %vm236, %v273, %v281
    %v288 = vsel %vm236, %v277, %v285
    %v289 = vlaneseq
    %v290 = vshrl.u32 %v289, 7
    %v291 = vsub.s32 0, %v290
    %v292 = vrot.slane %v270, %v291
    %v293 = vsub.f32 %v287, %v292
    %v294 = vsub.f32 %v288, %v292
    %v295 = vand.u32 2147483647, %v293
    %v296 = vand.u32 2147483647, %v294
    %v297 = vadd.f32 %v268, %v295
    %v298 = vadd.f32 %v269, %v296
    %v299 = vld [vmem:[#allocation10 + $0x2] sm:$0x1]
    %300 = vset.pattern.permute.xlu0 2
    %301 = vperm.xlu0 %300, %v225
    %v302 = vpop.permute.xlu0 %301
    %304 = vset.pattern.permute.xlu0 2
    %305 = vperm.xlu0 %304, %v226
    %v306 = vpop.permute.xlu0 %305
    %308 = vset.pattern.permute.xlu0 2
    %309 = vperm.xlu0 %308, %v227
    %v310 = vpop.permute.xlu0 %309
    %312 = vset.pattern.permute.xlu0 2
    %313 = vperm.xlu0 %312, %v228
    %v314 = vpop.permute.xlu0 %313
    %v316 = vsel %vm236, %v302, %v310
    %v317 = vsel %vm236, %v306, %v314
    %v318 = vlaneseq
    %v319 = vshrl.u32 %v318, 7
    %v320 = vsub.s32 0, %v319
    %v321 = vrot.slane %v299, %v320
    %v322 = vsub.f32 %v316, %v321
    %v323 = vsub.f32 %v317, %v321
    %v324 = vand.u32 2147483647, %v322
    %v325 = vand.u32 2147483647, %v323
    %v326 = vadd.f32 %v297, %v324
    %v327 = vadd.f32 %v298, %v325
    %v328 = vld [vmem:[#allocation10 + $0x3] sm:$0x1]
    %329 = vset.pattern.permute.xlu0 3
    %330 = vperm.xlu0 %329, %v225
    %v331 = vpop.permute.xlu0 %330
    %333 = vset.pattern.permute.xlu0 3
    %334 = vperm.xlu0 %333, %v226
    %v335 = vpop.permute.xlu0 %334
    %337 = vset.pattern.permute.xlu0 3
    %338 = vperm.xlu0 %337, %v227
    %v339 = vpop.permute.xlu0 %338
    %341 = vset.pattern.permute.xlu0 3
    %342 = vperm.xlu0 %341, %v228
    %v343 = vpop.permute.xlu0 %342
    %v345 = vsel %vm236, %v331, %v339
    %v346 = vsel %vm236, %v335, %v343
    %v347 = vlaneseq
    %v348 = vshrl.u32 %v347, 7
    %v349 = vsub.s32 0, %v348
    %v350 = vrot.slane %v328, %v349
    %v351 = vsub.f32 %v345, %v350
    %v352 = vsub.f32 %v346, %v350
    %v353 = vand.u32 2147483647, %v351
    %v354 = vand.u32 2147483647, %v352
    %v355 = vadd.f32 %v326, %v353
    %v356 = vadd.f32 %v327, %v354
    %v357 = vld [vmem:[#allocation10 + $0x4] sm:$0x1]
    %358 = vset.pattern.permute.xlu0 4
    %359 = vperm.xlu0 %358, %v225
    %v360 = vpop.permute.xlu0 %359
    %362 = vset.pattern.permute.xlu0 4
    %363 = vperm.xlu0 %362, %v226
    %v364 = vpop.permute.xlu0 %363
    %366 = vset.pattern.permute.xlu0 4
    %367 = vperm.xlu0 %366, %v227
    %v368 = vpop.permute.xlu0 %367
    %370 = vset.pattern.permute.xlu0 4
    %371 = vperm.xlu0 %370, %v228
    %v372 = vpop.permute.xlu0 %371
    %v374 = vsel %vm236, %v360, %v368
    %v375 = vsel %vm236, %v364, %v372
    %v376 = vlaneseq
    %v377 = vshrl.u32 %v376, 7
    %v378 = vsub.s32 0, %v377
    %v379 = vrot.slane %v357, %v378
    %v380 = vsub.f32 %v374, %v379
    %v381 = vsub.f32 %v375, %v379
    %v382 = vand.u32 2147483647, %v380
    %v383 = vand.u32 2147483647, %v381
    %v384 = vadd.f32 %v355, %v382
    %v385 = vadd.f32 %v356, %v383
    %v386 = vld [vmem:[#allocation10 + $0x5] sm:$0x1]
    %387 = vset.pattern.permute.xlu0 5
    %388 = vperm.xlu0 %387, %v225
    %v389 = vpop.permute.xlu0 %388
    %391 = vset.pattern.permute.xlu0 5
    %392 = vperm.xlu0 %391, %v226
    %v393 = vpop.permute.xlu0 %392
    %395 = vset.pattern.permute.xlu0 5
    %396 = vperm.xlu0 %395, %v227
    %v397 = vpop.permute.xlu0 %396
    %399 = vset.pattern.permute.xlu0 5
    %400 = vperm.xlu0 %399, %v228
    %v401 = vpop.permute.xlu0 %400
    %v403 = vsel %vm236, %v389, %v397
    %v404 = vsel %vm236, %v393, %v401
    %v405 = vlaneseq
    %v406 = vshrl.u32 %v405, 7
    %v407 = vsub.s32 0, %v406
    %v408 = vrot.slane %v386, %v407
    %v409 = vsub.f32 %v403, %v408
    %v410 = vsub.f32 %v404, %v408
    %v411 = vand.u32 2147483647, %v409
    %v412 = vand.u32 2147483647, %v410
    %v413 = vadd.f32 %v384, %v411
    %v414 = vadd.f32 %v385, %v412
    %v415 = vld [vmem:[#allocation10 + $0x6] sm:$0x1]
    %416 = vset.pattern.permute.xlu0 6
    %417 = vperm.xlu0 %416, %v225
    %v418 = vpop.permute.xlu0 %417
    %420 = vset.pattern.permute.xlu0 6
    %421 = vperm.xlu0 %420, %v226
    %v422 = vpop.permute.xlu0 %421
    %424 = vset.pattern.permute.xlu0 6
    %425 = vperm.xlu0 %424, %v227
    %v426 = vpop.permute.xlu0 %425
    %428 = vset.pattern.permute.xlu0 6
    %429 = vperm.xlu0 %428, %v228
    %v430 = vpop.permute.xlu0 %429
    %v432 = vsel %vm236, %v418, %v426
    %v433 = vsel %vm236, %v422, %v430
    %v434 = vlaneseq
    %v435 = vshrl.u32 %v434, 7
    %v436 = vsub.s32 0, %v435
    %v437 = vrot.slane %v415, %v436
    %v438 = vsub.f32 %v432, %v437
    %v439 = vsub.f32 %v433, %v437
    %v440 = vand.u32 2147483647, %v438
    %v441 = vand.u32 2147483647, %v439
    %v442 = vadd.f32 %v413, %v440
    %v443 = vadd.f32 %v414, %v441
    %v444 = vld [vmem:[#allocation10 + $0x7] sm:$0x1]
    %445 = vset.pattern.permute.xlu0 7
    %446 = vperm.xlu0 %445, %v225
    %v447 = vpop.permute.xlu0 %446
    %449 = vset.pattern.permute.xlu0 7
    %450 = vperm.xlu0 %449, %v226
    %v451 = vpop.permute.xlu0 %450
    %453 = vset.pattern.permute.xlu0 7
    %454 = vperm.xlu0 %453, %v227
    %v455 = vpop.permute.xlu0 %454
    %457 = vset.pattern.permute.xlu0 7
    %458 = vperm.xlu0 %457, %v228
    %v459 = vpop.permute.xlu0 %458
    %v461 = vsel %vm236, %v447, %v455
    %v462 = vsel %vm236, %v451, %v459
    %v463 = vlaneseq
    %v464 = vshrl.u32 %v463, 7
    %v465 = vsub.s32 0, %v464
    %v466 = vrot.slane %v444, %v465
    %v467 = vsub.f32 %v461, %v466
    %v468 = vsub.f32 %v462, %v466
    %v469 = vand.u32 2147483647, %v467
    %v470 = vand.u32 2147483647, %v468
    %v471 = vadd.f32 %v442, %v469
    %v472 = vadd.f32 %v443, %v470
    %v473 = vld [vmem:[#allocation10 + $0x8] sm:$0x1]
    %474 = vset.pattern.permute.xlu0 8
    %475 = vperm.xlu0 %474, %v225
    %v476 = vpop.permute.xlu0 %475
    %478 = vset.pattern.permute.xlu0 8
    %479 = vperm.xlu0 %478, %v226
    %v480 = vpop.permute.xlu0 %479
    %482 = vset.pattern.permute.xlu0 8
    %483 = vperm.xlu0 %482, %v227
    %v484 = vpop.permute.xlu0 %483
    %486 = vset.pattern.permute.xlu0 8
    %487 = vperm.xlu0 %486, %v228
    %v488 = vpop.permute.xlu0 %487
    %v490 = vsel %vm236, %v476, %v484
    %v491 = vsel %vm236, %v480, %v488
    %v492 = vlaneseq
    %v493 = vshrl.u32 %v492, 7
    %v494 = vsub.s32 0, %v493
    %v495 = vrot.slane %v473, %v494
    %v496 = vsub.f32 %v490, %v495
    %v497 = vsub.f32 %v491, %v495
    %v498 = vand.u32 2147483647, %v496
    %v499 = vand.u32 2147483647, %v497
    %v500 = vadd.f32 %v471, %v498
    %v501 = vadd.f32 %v472, %v499
    %v502 = vld [vmem:[#allocation10 + $0x9] sm:$0x1]
    %503 = vset.pattern.permute.xlu0 9
    %504 = vperm.xlu0 %503, %v225
    %v505 = vpop.permute.xlu0 %504
    %507 = vset.pattern.permute.xlu0 9
    %508 = vperm.xlu0 %507, %v226
    %v509 = vpop.permute.xlu0 %508
    %511 = vset.pattern.permute.xlu0 9
    %512 = vperm.xlu0 %511, %v227
    %v513 = vpop.permute.xlu0 %512
    %515 = vset.pattern.permute.xlu0 9
    %516 = vperm.xlu0 %515, %v228
    %v517 = vpop.permute.xlu0 %516
    %v519 = vsel %vm236, %v505, %v513
    %v520 = vsel %vm236, %v509, %v517
    %v521 = vlaneseq
    %v522 = vshrl.u32 %v521, 7
    %v523 = vsub.s32 0, %v522
    %v524 = vrot.slane %v502, %v523
    %v525 = vsub.f32 %v519, %v524
    %v526 = vsub.f32 %v520, %v524
    %v527 = vand.u32 2147483647, %v525
    %v528 = vand.u32 2147483647, %v526
    %v529 = vadd.f32 %v500, %v527
    %v530 = vadd.f32 %v501, %v528
    %v531 = vld [vmem:[#allocation10 + $0xa] sm:$0x1]
    %532 = vset.pattern.permute.xlu0 10
    %533 = vperm.xlu0 %532, %v225
    %v534 = vpop.permute.xlu0 %533
    %536 = vset.pattern.permute.xlu0 10
    %537 = vperm.xlu0 %536, %v226
    %v538 = vpop.permute.xlu0 %537
    %540 = vset.pattern.permute.xlu0 10
    %541 = vperm.xlu0 %540, %v227
    %v542 = vpop.permute.xlu0 %541
    %544 = vset.pattern.permute.xlu0 10
    %545 = vperm.xlu0 %544, %v228
    %v546 = vpop.permute.xlu0 %545
    %v548 = vsel %vm236, %v534, %v542
    %v549 = vsel %vm236, %v538, %v546
    %v550 = vlaneseq
    %v551 = vshrl.u32 %v550, 7
    %v552 = vsub.s32 0, %v551
    %v553 = vrot.slane %v531, %v552
    %v554 = vsub.f32 %v548, %v553
    %v555 = vsub.f32 %v549, %v553
    %v556 = vand.u32 2147483647, %v554
    %v557 = vand.u32 2147483647, %v555
    %v558 = vadd.f32 %v529, %v556
    %v559 = vadd.f32 %v530, %v557
    %v560 = vld [vmem:[#allocation10 + $0xb] sm:$0x1]
    %561 = vset.pattern.permute.xlu0 11
    %562 = vperm.xlu0 %561, %v225
    %v563 = vpop.permute.xlu0 %562
    %565 = vset.pattern.permute.xlu0 11
    %566 = vperm.xlu0 %565, %v226
    %v567 = vpop.permute.xlu0 %566
    %569 = vset.pattern.permute.xlu0 11
    %570 = vperm.xlu0 %569, %v227
    %v571 = vpop.permute.xlu0 %570
    %573 = vset.pattern.permute.xlu0 11
    %574 = vperm.xlu0 %573, %v228
    %v575 = vpop.permute.xlu0 %574
    %v577 = vsel %vm236, %v563, %v571
    %v578 = vsel %vm236, %v567, %v575
    %v579 = vlaneseq
    %v580 = vshrl.u32 %v579, 7
    %v581 = vsub.s32 0, %v580
    %v582 = vrot.slane %v560, %v581
    %v583 = vsub.f32 %v577, %v582
    %v584 = vsub.f32 %v578, %v582
    %v585 = vand.u32 2147483647, %v583
    %v586 = vand.u32 2147483647, %v584
    %v587 = vadd.f32 %v558, %v585
    %v588 = vadd.f32 %v559, %v586
    %v589 = vld [vmem:[#allocation10 + $0xc] sm:$0x1]
    %590 = vset.pattern.permute.xlu0 12
    %591 = vperm.xlu0 %590, %v225
    %v592 = vpop.permute.xlu0 %591
    %594 = vset.pattern.permute.xlu0 12
    %595 = vperm.xlu0 %594, %v226
    %v596 = vpop.permute.xlu0 %595
    %598 = vset.pattern.permute.xlu0 12
    %599 = vperm.xlu0 %598, %v227
    %v600 = vpop.permute.xlu0 %599
    %602 = vset.pattern.permute.xlu0 12
    %603 = vperm.xlu0 %602, %v228
    %v604 = vpop.permute.xlu0 %603
    %v606 = vsel %vm236, %v592, %v600
    %v607 = vsel %vm236, %v596, %v604
    %v608 = vlaneseq
    %v609 = vshrl.u32 %v608, 7
    %v610 = vsub.s32 0, %v609
    %v611 = vrot.slane %v589, %v610
    %v612 = vsub.f32 %v606, %v611
    %v613 = vsub.f32 %v607, %v611
    %v614 = vand.u32 2147483647, %v612
    %v615 = vand.u32 2147483647, %v613
    %v616 = vadd.f32 %v587, %v614
    %v617 = vadd.f32 %v588, %v615
    %v618 = vld [vmem:[#allocation10 + $0xd] sm:$0x1]
    %619 = vset.pattern.permute.xlu0 13
    %620 = vperm.xlu0 %619, %v225
    %v621 = vpop.permute.xlu0 %620
    %623 = vset.pattern.permute.xlu0 13
    %624 = vperm.xlu0 %623, %v226
    %v625 = vpop.permute.xlu0 %624
    %627 = vset.pattern.permute.xlu0 13
    %628 = vperm.xlu0 %627, %v227
    %v629 = vpop.permute.xlu0 %628
    %631 = vset.pattern.permute.xlu0 13
    %632 = vperm.xlu0 %631, %v228
    %v633 = vpop.permute.xlu0 %632
    %v635 = vsel %vm236, %v621, %v629
    %v636 = vsel %vm236, %v625, %v633
    %v637 = vlaneseq
    %v638 = vshrl.u32 %v637, 7
    %v639 = vsub.s32 0, %v638
    %v640 = vrot.slane %v618, %v639
    %v641 = vsub.f32 %v635, %v640
    %v642 = vsub.f32 %v636, %v640
    %v643 = vand.u32 2147483647, %v641
    %v644 = vand.u32 2147483647, %v642
    %v645 = vadd.f32 %v616, %v643
    %v646 = vadd.f32 %v617, %v644
    %v647 = vld [vmem:[#allocation10 + $0xe] sm:$0x1]
    %648 = vset.pattern.permute.xlu0 14
    %649 = vperm.xlu0 %648, %v225
    %v650 = vpop.permute.xlu0 %649
    %652 = vset.pattern.permute.xlu0 14
    %653 = vperm.xlu0 %652, %v226
    %v654 = vpop.permute.xlu0 %653
    %656 = vset.pattern.permute.xlu0 14
    %657 = vperm.xlu0 %656, %v227
    %v658 = vpop.permute.xlu0 %657
    %660 = vset.pattern.permute.xlu0 14
    %661 = vperm.xlu0 %660, %v228
    %v662 = vpop.permute.xlu0 %661
    %v664 = vsel %vm236, %v650, %v658
    %v665 = vsel %vm236, %v654, %v662
    %v666 = vlaneseq
    %v667 = vshrl.u32 %v666, 7
    %v668 = vsub.s32 0, %v667
    %v669 = vrot.slane %v647, %v668
    %v670 = vsub.f32 %v664, %v669
    %v671 = vsub.f32 %v665, %v669
    %v672 = vand.u32 2147483647, %v670
    %v673 = vand.u32 2147483647, %v671
    %v674 = vadd.f32 %v645, %v672
    %v675 = vadd.f32 %v646, %v673
    %v676 = vld [vmem:[#allocation10 + $0xf] sm:$0x1]
    %677 = vset.pattern.permute.xlu0 15
    %678 = vperm.xlu0 %677, %v225
    %v679 = vpop.permute.xlu0 %678
    %681 = vset.pattern.permute.xlu0 15
    %682 = vperm.xlu0 %681, %v226
    %v683 = vpop.permute.xlu0 %682
    %685 = vset.pattern.permute.xlu0 15
    %686 = vperm.xlu0 %685, %v227
    %v687 = vpop.permute.xlu0 %686
    %689 = vset.pattern.permute.xlu0 15
    %690 = vperm.xlu0 %689, %v228
    %v691 = vpop.permute.xlu0 %690
    %v693 = vsel %vm236, %v679, %v687
    %v694 = vsel %vm236, %v683, %v691
    %v695 = vlaneseq
    %v696 = vshrl.u32 %v695, 7
    %v697 = vsub.s32 0, %v696
    %v698 = vrot.slane %v676, %v697
    %v699 = vsub.f32 %v693, %v698
    %v700 = vsub.f32 %v694, %v698
    %v701 = vand.u32 2147483647, %v699
    %v702 = vand.u32 2147483647, %v700
    %v703 = vadd.f32 %v674, %v701
    %v704 = vadd.f32 %v675, %v702
    %v705 = vld [vmem:[%s6] sm:$0x1]
    %v707 = vlaneseq
    %v708 = vshrl.u32 %v707, 7
    %v709 = vsub.s32 0, %v708
    %v710 = vrot.slane %v705, %v709
    %v712 = vmul.f32 %v710, %v703
    %v713 = vmul.f32 %v710, %v704
    %v714 = vadd.f32 %v712, %v223
    %v715 = vadd.f32 %v713, %v224
    %716 = vst [vmem:[#allocation11] sm:$0xff] %v714
    %717 = vst [vmem:[#allocation11 + $0x8] sm:$0xff] %v715
    // Predicated region
    $region50: #{tpu_custom_call.1} parent=1 // pred_check
      _
    $region51: #{tpu_custom_call.1} parent=1 // pred_check_branch
      %719 = sbr.rel (0) target = $region53
    $region52: #{tpu_custom_call.1} parent=1 // pred_region
      %s721 = ssub.s32 256, 256
      %722 = vsyncadd [#allocation4], %s721
      %s723 = sshll.u32 [#allocation11], 4
      %s724 = int_to_ptr.vmem [resolvable:$true] %s723
      %729 = dma.vmem_to_hbm [thread:$0]  %s724, 256, %s7, [#allocation4], 128, 128, 8
    $region53: #{tpu_custom_call.1} parent=1 // pred_fallthru
      _
    // Predicated region
    $region54: #{tpu_custom_call.1} parent=1 // pred_check
      _
    $region55: #{tpu_custom_call.1} parent=1 // pred_check_branch
      %731 = sbr.rel (0) target = $region57
    $region56: #{tpu_custom_call.1} parent=1 // pred_region
      %732 = dma.done [#allocation4], 256
    $region57: #{tpu_custom_call.1} parent=1 // pred_fallthru
      _
    %733 = vsyncpa [#allocation3], 1
    %734 = vsyncpa [#allocation6], 1
    %735 = vsyncpa [#allocation9], 1
    %736 = vsyncpa [#allocation4], 1

</llo_original>
